<compile_context>
chip_gen: v5e
topology: v5e:2x2
jax: 0.10.0
libtpu: 0.0.40
codegen_flags: <defaults>
</compile_context>

<pallas_src>
import functools

import jax
import jax.numpy as jnp
from jax.experimental import pallas as pl
from jax.experimental.pallas import tpu as pltpu  # noqa: F401 (TPU backend)


def _lstm_policy_kernel(x_ref, wih_ref, whh_ref, b_ref, wlin_ref, blin_ref,
                        mu_ref, mus_ref, *, hidden_size, time_step):
    """Entire time_step-long recurrence in a single kernel invocation."""
    H = hidden_size
    B = x_ref.shape[0]
    n_mu = mu_ref.shape[1]

    # Loop-invariant work hoisted out of the recurrence:
    #   x @ W_ih^T + (b_ih + b_hh)   (input is the same every step — see TODO)
    xw = (jnp.dot(x_ref[...], wih_ref[...], preferred_element_type=jnp.float32)
          + b_ref[...])
    whh = whh_ref[...]
    wlin = wlin_ref[...]
    blin = blin_ref[...]

    # Recurrent state lives in vregs (tiny: (B, H) = (2, 32)).
    h = jnp.zeros((B, H), dtype=jnp.float32)
    c = jnp.zeros((B, H), dtype=jnp.float32)
    mu = jnp.zeros((B, n_mu), dtype=jnp.float32)

    # Static, fully-unrolled time loop; per-step output rows are static-index
    # stores into the single resident `mus` block.
    for t in range(time_step):
        gates = xw + jnp.dot(h, whh, preferred_element_type=jnp.float32)
        i_g = jax.nn.sigmoid(gates[:, 0:H])
        f_g = jax.nn.sigmoid(gates[:, H:2 * H])
        g_g = jnp.tanh(gates[:, 2 * H:3 * H])
        o_g = jax.nn.sigmoid(gates[:, 3 * H:4 * H])

        c = f_g * c + i_g * g_g
        h = o_g * jnp.tanh(c)

        # Linear + Softmax (nn.Softmax() on 2-D defaults to dim=1)
        lin = jnp.dot(h, wlin, preferred_element_type=jnp.float32) + blin
        m = jnp.max(lin, axis=-1, keepdims=True)
        e = jnp.exp(lin - m)
        inv = pl.reciprocal(jnp.sum(e, axis=-1, keepdims=True), approx=True)
        sm = e * inv

        mu = sm[:, 0:n_mu]
        mus_ref[t] = 10.0 * mu

    mu_ref[...] = mu  # final-step mu (== sigma)


def lstm_policy_forward(x, params, *, time_step):
    """Runs the recurrence in one pallas_call.

    Returns (mu, sigma, mus) with mu == sigma == mu_sigma[:, :input_size-1]
    of the last step, and mus of shape [time_step, batch, input_size-1].
    """
    w_ih, w_hh, b_ih, b_hh, w_lin, b_lin = params
    B, input_size = x.shape
    H = w_hh.shape[1]
    n_out = w_lin.shape[0]          # 2 * (input_size - 1)
    n_mu = input_size - 1

    wih_t = jnp.transpose(w_ih)                     # (input_size, 4H)
    whh_t = jnp.transpose(w_hh)                     # (H, 4H)
    b = (b_ih + b_hh).reshape(1, 4 * H)             # (1, 4H)
    wlin_t = jnp.transpose(w_lin)                   # (H, n_out)
    blin = b_lin.reshape(1, n_out)                  # (1, n_out)

    kernel = functools.partial(_lstm_policy_kernel,
                               hidden_size=H, time_step=time_step)

    # No grid: every operand is a single full-array VMEM block; `mus` is
    # resident for the whole recurrence and written back to HBM once.
    mu, mus = pl.pallas_call(
        kernel,
        out_shape=(
            jax.ShapeDtypeStruct((B, n_mu), jnp.float32),
            jax.ShapeDtypeStruct((time_step, B, n_mu), jnp.float32),
        ),
    )(x, wih_t, whh_t, b, wlin_t, blin)

    sigma = mu  # reference code slices the same columns for mu and sigma
    return mu, sigma, mus


def init_params(key, input_size, hidden_size):
    """Deterministic parameter init matching the nn.LSTMCell / nn.Linear shapes."""
    k = jax.random.split(key, 6)
    s_rnn = 1.0 / jnp.sqrt(hidden_size)
    n_out = 2 * (input_size - 1)
    s_lin = 1.0 / jnp.sqrt(hidden_size)
    w_ih = jax.random.uniform(k[0], (4 * hidden_size, input_size),
                              jnp.float32, -s_rnn, s_rnn)
    w_hh = jax.random.uniform(k[1], (4 * hidden_size, hidden_size),
                              jnp.float32, -s_rnn, s_rnn)
    b_ih = jax.random.uniform(k[2], (4 * hidden_size,), jnp.float32, -s_rnn, s_rnn)
    b_hh = jax.random.uniform(k[3], (4 * hidden_size,), jnp.float32, -s_rnn, s_rnn)
    w_lin = jax.random.uniform(k[4], (n_out, hidden_size),
                               jnp.float32, -s_lin, s_lin)
    b_lin = jax.random.uniform(k[5], (n_out,), jnp.float32, -s_lin, s_lin)
    return (w_ih, w_hh, b_ih, b_hh, w_lin, b_lin)


def _ref_forward(x, params, time_step):
    """Pure-JAX reference of the same (memory-less) forward pass."""
    w_ih, w_hh, b_ih, b_hh, w_lin, b_lin = params
    B, input_size = x.shape
    H = w_hh.shape[1]
    n_mu = input_size - 1
    h = jnp.zeros((B, H), jnp.float32)
    c = jnp.zeros((B, H), jnp.float32)
    mus = []
    mu = None
    for _ in range(time_step):
        gates = x @ w_ih.T + h @ w_hh.T + b_ih + b_hh
        i_g = jax.nn.sigmoid(gates[:, 0:H])
        f_g = jax.nn.sigmoid(gates[:, H:2 * H])
        g_g = jnp.tanh(gates[:, 2 * H:3 * H])
        o_g = jax.nn.sigmoid(gates[:, 3 * H:4 * H])
        c = f_g * c + i_g * g_g
        h = o_g * jnp.tanh(c)
        sm = jax.nn.softmax(h @ w_lin.T + b_lin, axis=1)
        mu = sm[:, 0:n_mu]
        mus.append(10.0 * mu)
    return mu, jnp.stack(mus, axis=0)


if __name__ == "__main__":
    batch = 2
    input_size = 4
    hidden_size = 32
    time_step = 8

    key = jax.random.PRNGKey(0)
    pkey, xkey = jax.random.split(key)
    params = init_params(pkey, input_size, hidden_size)
    x = jax.random.normal(xkey, (batch, input_size), jnp.float32)

    mu, sigma, mus = lstm_policy_forward(x, params, time_step=time_step)
    jax.block_until_ready((mu, sigma, mus))

    assert mu.shape == (batch, input_size - 1)
    assert sigma.shape == (batch, input_size - 1)
    assert mus.shape == (time_step, batch, input_size - 1)

    mu_ref, mus_ref = _ref_forward(x, params, time_step)
    assert jnp.allclose(mu, mu_ref, rtol=1e-2, atol=1e-3)
    assert jnp.allclose(mus, mus_ref, rtol=1e-2, atol=1e-3)

    print("KERNEL_OK")
</pallas_src>

<mosaic_0001>
module attributes {stable_mosaic.version = 11 : i64} {
  func.func @_lstm_policy_kernel(%arg0: memref<2x4xf32, #tpu.memory_space<vmem>>, %arg1: memref<4x128xf32, #tpu.memory_space<vmem>>, %arg2: memref<32x128xf32, #tpu.memory_space<vmem>>, %arg3: memref<1x128xf32, #tpu.memory_space<vmem>>, %arg4: memref<32x6xf32, #tpu.memory_space<vmem>>, %arg5: memref<1x6xf32, #tpu.memory_space<vmem>>, %arg6: memref<2x3xf32, #tpu.memory_space<vmem>>, %arg7: memref<8x2x3xf32, #tpu.memory_space<vmem>>) attributes {dimension_semantics = [], scalar_prefetch = 0 : i64, scratch_operands = 0 : i64, tpu.core_type = #tpu.core_type<tc>} {
    %c0 = arith.constant 0 : index
    %c0_0 = arith.constant 0 : index
    %0 = vector.load %arg0[%c0, %c0_0] : memref<2x4xf32, #tpu.memory_space<vmem>>, vector<2x4xf32>
    %c0_1 = arith.constant 0 : index
    %c0_2 = arith.constant 0 : index
    %1 = vector.load %arg1[%c0_1, %c0_2] : memref<4x128xf32, #tpu.memory_space<vmem>>, vector<4x128xf32>
    %cst = arith.constant dense<0.000000e+00> : vector<2x128xf32>
    %2 = tpu.matmul %0, %1, %cst {dimension_numbers = #tpu.dot_dimension_numbers<[1], [0], [0], [1], [0, 0, 1, 1], [], []>} : vector<2x4xf32>, vector<4x128xf32>, vector<2x128xf32> -> vector<2x128xf32>
    %c0_3 = arith.constant 0 : index
    %c0_4 = arith.constant 0 : index
    %3 = vector.load %arg3[%c0_3, %c0_4] : memref<1x128xf32, #tpu.memory_space<vmem>>, vector<1x128xf32>
    %4 = vector.broadcast %3 : vector<1x128xf32> to vector<2x128xf32>
    %5 = arith.addf %2, %4 : vector<2x128xf32>
    %c0_5 = arith.constant 0 : index
    %c0_6 = arith.constant 0 : index
    %6 = vector.load %arg2[%c0_5, %c0_6] : memref<32x128xf32, #tpu.memory_space<vmem>>, vector<32x128xf32>
    %c0_7 = arith.constant 0 : index
    %c0_8 = arith.constant 0 : index
    %7 = vector.load %arg4[%c0_7, %c0_8] : memref<32x6xf32, #tpu.memory_space<vmem>>, vector<32x6xf32>
    %c0_9 = arith.constant 0 : index
    %c0_10 = arith.constant 0 : index
    %8 = vector.load %arg5[%c0_9, %c0_10] : memref<1x6xf32, #tpu.memory_space<vmem>>, vector<1x6xf32>
    %cst_11 = arith.constant 0.000000e+00 : f32
    %9 = vector.broadcast %cst_11 : f32 to vector<2x32xf32>
    %cst_12 = arith.constant 0.000000e+00 : f32
    %10 = vector.broadcast %cst_12 : f32 to vector<2x32xf32>
    %cst_13 = arith.constant dense<0.000000e+00> : vector<2x128xf32>
    %11 = tpu.matmul %9, %6, %cst_13 {dimension_numbers = #tpu.dot_dimension_numbers<[1], [0], [0], [1], [0, 0, 1, 1], [], []>} : vector<2x32xf32>, vector<32x128xf32>, vector<2x128xf32> -> vector<2x128xf32>
    %12 = arith.addf %5, %11 : vector<2x128xf32>
    %13 = vector.extract_strided_slice %12 {offsets = [0, 0], sizes = [2, 32], strides = [1, 1]} : vector<2x128xf32> to vector<2x32xf32>
    %14 = arith.negf %13 : vector<2x32xf32>
    %15 = math.exp %14 : vector<2x32xf32>
    %cst_14 = arith.constant 1.000000e+00 : f32
    %16 = vector.broadcast %cst_14 : f32 to vector<2x32xf32>
    %17 = arith.addf %16, %15 : vector<2x32xf32>
    %18 = arith.divf %16, %17 : vector<2x32xf32>
    %19 = vector.extract_strided_slice %12 {offsets = [0, 32], sizes = [2, 32], strides = [1, 1]} : vector<2x128xf32> to vector<2x32xf32>
    %20 = arith.negf %19 : vector<2x32xf32>
    %21 = math.exp %20 : vector<2x32xf32>
    %cst_15 = arith.constant 1.000000e+00 : f32
    %22 = vector.broadcast %cst_15 : f32 to vector<2x32xf32>
    %23 = arith.addf %22, %21 : vector<2x32xf32>
    %24 = arith.divf %22, %23 : vector<2x32xf32>
    %25 = vector.extract_strided_slice %12 {offsets = [0, 64], sizes = [2, 32], strides = [1, 1]} : vector<2x128xf32> to vector<2x32xf32>
    %26 = math.tanh %25 : vector<2x32xf32>
    %27 = vector.extract_strided_slice %12 {offsets = [0, 96], sizes = [2, 32], strides = [1, 1]} : vector<2x128xf32> to vector<2x32xf32>
    %28 = arith.negf %27 : vector<2x32xf32>
    %29 = math.exp %28 : vector<2x32xf32>
    %cst_16 = arith.constant 1.000000e+00 : f32
    %30 = vector.broadcast %cst_16 : f32 to vector<2x32xf32>
    %31 = arith.addf %30, %29 : vector<2x32xf32>
    %32 = arith.divf %30, %31 : vector<2x32xf32>
    %33 = arith.mulf %24, %10 : vector<2x32xf32>
    %34 = arith.mulf %18, %26 : vector<2x32xf32>
    %35 = arith.addf %33, %34 : vector<2x32xf32>
    %36 = math.tanh %35 : vector<2x32xf32>
    %37 = arith.mulf %32, %36 : vector<2x32xf32>
    %cst_17 = arith.constant dense<0.000000e+00> : vector<2x6xf32>
    %38 = tpu.matmul %37, %7, %cst_17 {dimension_numbers = #tpu.dot_dimension_numbers<[1], [0], [0], [1], [0, 0, 1, 1], [], []>} : vector<2x32xf32>, vector<32x6xf32>, vector<2x6xf32> -> vector<2x6xf32>
    %39 = vector.broadcast %8 : vector<1x6xf32> to vector<2x6xf32>
    %40 = arith.addf %38, %39 : vector<2x6xf32>
    %cst_18 = arith.constant dense<0xFF800000> : vector<2xf32>
    %41 = vector.multi_reduction <maximumf>, %40, %cst_18 [1] : vector<2x6xf32> to vector<2xf32>
    %42 = vector.shape_cast %41 : vector<2xf32> to vector<2x1xf32>
    %43 = vector.broadcast %42 : vector<2x1xf32> to vector<2x6xf32>
    %44 = arith.subf %40, %43 : vector<2x6xf32>
    %45 = math.exp %44 : vector<2x6xf32>
    %cst_19 = arith.constant dense<0.000000e+00> : vector<2xf32>
    %46 = vector.multi_reduction <add>, %45, %cst_19 [1] : vector<2x6xf32> to vector<2xf32>
    %47 = vector.shape_cast %46 : vector<2xf32> to vector<2x1xf32>
    %48 = tpu.reciprocal %47 {approx = true} : vector<2x1xf32> -> vector<2x1xf32>
    %49 = vector.broadcast %48 : vector<2x1xf32> to vector<2x6xf32>
    %50 = arith.mulf %45, %49 : vector<2x6xf32>
    %51 = vector.extract_strided_slice %50 {offsets = [0, 0], sizes = [2, 3], strides = [1, 1]} : vector<2x6xf32> to vector<2x3xf32>
    %cst_20 = arith.constant 1.000000e+01 : f32
    %52 = vector.broadcast %cst_20 : f32 to vector<2x3xf32>
    %53 = arith.mulf %52, %51 : vector<2x3xf32>
    %c0_21 = arith.constant 0 : index
    %c0_22 = arith.constant 0 : index
    %c0_23 = arith.constant 0 : index
    %54 = vector.load %arg7[%c0_21, %c0_22, %c0_23] : memref<8x2x3xf32, #tpu.memory_space<vmem>>, vector<1x2x3xf32>
    %55 = vector.shape_cast %54 : vector<1x2x3xf32> to vector<2x3xf32>
    %56 = vector.shape_cast %53 : vector<2x3xf32> to vector<1x2x3xf32>
    tpu.vector_store %arg7[%c0_21, %c0_22, %c0_23], %56 {strides = array<i32>} : memref<8x2x3xf32, #tpu.memory_space<vmem>>, vector<1x2x3xf32>,
    %cst_24 = arith.constant dense<0.000000e+00> : vector<2x128xf32>
    %57 = tpu.matmul %37, %6, %cst_24 {dimension_numbers = #tpu.dot_dimension_numbers<[1], [0], [0], [1], [0, 0, 1, 1], [], []>} : vector<2x32xf32>, vector<32x128xf32>, vector<2x128xf32> -> vector<2x128xf32>
    %58 = arith.addf %5, %57 : vector<2x128xf32>
    %59 = vector.extract_strided_slice %58 {offsets = [0, 0], sizes = [2, 32], strides = [1, 1]} : vector<2x128xf32> to vector<2x32xf32>
    %60 = arith.negf %59 : vector<2x32xf32>
    %61 = math.exp %60 : vector<2x32xf32>
    %cst_25 = arith.constant 1.000000e+00 : f32
    %62 = vector.broadcast %cst_25 : f32 to vector<2x32xf32>
    %63 = arith.addf %62, %61 : vector<2x32xf32>
    %64 = arith.divf %62, %63 : vector<2x32xf32>
    %65 = vector.extract_strided_slice %58 {offsets = [0, 32], sizes = [2, 32], strides = [1, 1]} : vector<2x128xf32> to vector<2x32xf32>
    %66 = arith.negf %65 : vector<2x32xf32>
    %67 = math.exp %66 : vector<2x32xf32>
    %cst_26 = arith.constant 1.000000e+00 : f32
    %68 = vector.broadcast %cst_26 : f32 to vector<2x32xf32>
    %69 = arith.addf %68, %67 : vector<2x32xf32>
    %70 = arith.divf %68, %69 : vector<2x32xf32>
    %71 = vector.extract_strided_slice %58 {offsets = [0, 64], sizes = [2, 32], strides = [1, 1]} : vector<2x128xf32> to vector<2x32xf32>
    %72 = math.tanh %71 : vector<2x32xf32>
    %73 = vector.extract_strided_slice %58 {offsets = [0, 96], sizes = [2, 32], strides = [1, 1]} : vector<2x128xf32> to vector<2x32xf32>
    %74 = arith.negf %73 : vector<2x32xf32>
    %75 = math.exp %74 : vector<2x32xf32>
    %cst_27 = arith.constant 1.000000e+00 : f32
    %76 = vector.broadcast %cst_27 : f32 to vector<2x32xf32>
    %77 = arith.addf %76, %75 : vector<2x32xf32>
    %78 = arith.divf %76, %77 : vector<2x32xf32>
    %79 = arith.mulf %70, %35 : vector<2x32xf32>
    %80 = arith.mulf %64, %72 : vector<2x32xf32>
    %81 = arith.addf %79, %80 : vector<2x32xf32>
    %82 = math.tanh %81 : vector<2x32xf32>
    %83 = arith.mulf %78, %82 : vector<2x32xf32>
    %cst_28 = arith.constant dense<0.000000e+00> : vector<2x6xf32>
    %84 = tpu.matmul %83, %7, %cst_28 {dimension_numbers = #tpu.dot_dimension_numbers<[1], [0], [0], [1], [0, 0, 1, 1], [], []>} : vector<2x32xf32>, vector<32x6xf32>, vector<2x6xf32> -> vector<2x6xf32>
    %85 = vector.broadcast %8 : vector<1x6xf32> to vector<2x6xf32>
    %86 = arith.addf %84, %85 : vector<2x6xf32>
    %cst_29 = arith.constant dense<0xFF800000> : vector<2xf32>
    %87 = vector.multi_reduction <maximumf>, %86, %cst_29 [1] : vector<2x6xf32> to vector<2xf32>
    %88 = vector.shape_cast %87 : vector<2xf32> to vector<2x1xf32>
    %89 = vector.broadcast %88 : vector<2x1xf32> to vector<2x6xf32>
    %90 = arith.subf %86, %89 : vector<2x6xf32>
    %91 = math.exp %90 : vector<2x6xf32>
    %cst_30 = arith.constant dense<0.000000e+00> : vector<2xf32>
    %92 = vector.multi_reduction <add>, %91, %cst_30 [1] : vector<2x6xf32> to vector<2xf32>
    %93 = vector.shape_cast %92 : vector<2xf32> to vector<2x1xf32>
    %94 = tpu.reciprocal %93 {approx = true} : vector<2x1xf32> -> vector<2x1xf32>
    %95 = vector.broadcast %94 : vector<2x1xf32> to vector<2x6xf32>
    %96 = arith.mulf %91, %95 : vector<2x6xf32>
    %97 = vector.extract_strided_slice %96 {offsets = [0, 0], sizes = [2, 3], strides = [1, 1]} : vector<2x6xf32> to vector<2x3xf32>
    %cst_31 = arith.constant 1.000000e+01 : f32
    %98 = vector.broadcast %cst_31 : f32 to vector<2x3xf32>
    %99 = arith.mulf %98, %97 : vector<2x3xf32>
    %c1 = arith.constant 1 : index
    %c0_32 = arith.constant 0 : index
    %c0_33 = arith.constant 0 : index
    %100 = vector.load %arg7[%c1, %c0_32, %c0_33] : memref<8x2x3xf32, #tpu.memory_space<vmem>>, vector<1x2x3xf32>
    %101 = vector.shape_cast %100 : vector<1x2x3xf32> to vector<2x3xf32>
    %102 = vector.shape_cast %99 : vector<2x3xf32> to vector<1x2x3xf32>
    tpu.vector_store %arg7[%c1, %c0_32, %c0_33], %102 {strides = array<i32>} : memref<8x2x3xf32, #tpu.memory_space<vmem>>, vector<1x2x3xf32>,
    %cst_34 = arith.constant dense<0.000000e+00> : vector<2x128xf32>
    %103 = tpu.matmul %83, %6, %cst_34 {dimension_numbers = #tpu.dot_dimension_numbers<[1], [0], [0], [1], [0, 0, 1, 1], [], []>} : vector<2x32xf32>, vector<32x128xf32>, vector<2x128xf32> -> vector<2x128xf32>
    %104 = arith.addf %5, %103 : vector<2x128xf32>
    %105 = vector.extract_strided_slice %104 {offsets = [0, 0], sizes = [2, 32], strides = [1, 1]} : vector<2x128xf32> to vector<2x32xf32>
    %106 = arith.negf %105 : vector<2x32xf32>
    %107 = math.exp %106 : vector<2x32xf32>
    %cst_35 = arith.constant 1.000000e+00 : f32
    %108 = vector.broadcast %cst_35 : f32 to vector<2x32xf32>
    %109 = arith.addf %108, %107 : vector<2x32xf32>
    %110 = arith.divf %108, %109 : vector<2x32xf32>
    %111 = vector.extract_strided_slice %104 {offsets = [0, 32], sizes = [2, 32], strides = [1, 1]} : vector<2x128xf32> to vector<2x32xf32>
    %112 = arith.negf %111 : vector<2x32xf32>
    %113 = math.exp %112 : vector<2x32xf32>
    %cst_36 = arith.constant 1.000000e+00 : f32
    %114 = vector.broadcast %cst_36 : f32 to vector<2x32xf32>
    %115 = arith.addf %114, %113 : vector<2x32xf32>
    %116 = arith.divf %114, %115 : vector<2x32xf32>
    %117 = vector.extract_strided_slice %104 {offsets = [0, 64], sizes = [2, 32], strides = [1, 1]} : vector<2x128xf32> to vector<2x32xf32>
    %118 = math.tanh %117 : vector<2x32xf32>
    %119 = vector.extract_strided_slice %104 {offsets = [0, 96], sizes = [2, 32], strides = [1, 1]} : vector<2x128xf32> to vector<2x32xf32>
    %120 = arith.negf %119 : vector<2x32xf32>
    %121 = math.exp %120 : vector<2x32xf32>
    %cst_37 = arith.constant 1.000000e+00 : f32
    %122 = vector.broadcast %cst_37 : f32 to vector<2x32xf32>
    %123 = arith.addf %122, %121 : vector<2x32xf32>
    %124 = arith.divf %122, %123 : vector<2x32xf32>
    %125 = arith.mulf %116, %81 : vector<2x32xf32>
    %126 = arith.mulf %110, %118 : vector<2x32xf32>
    %127 = arith.addf %125, %126 : vector<2x32xf32>
    %128 = math.tanh %127 : vector<2x32xf32>
    %129 = arith.mulf %124, %128 : vector<2x32xf32>
    %cst_38 = arith.constant dense<0.000000e+00> : vector<2x6xf32>
    %130 = tpu.matmul %129, %7, %cst_38 {dimension_numbers = #tpu.dot_dimension_numbers<[1], [0], [0], [1], [0, 0, 1, 1], [], []>} : vector<2x32xf32>, vector<32x6xf32>, vector<2x6xf32> -> vector<2x6xf32>
    %131 = vector.broadcast %8 : vector<1x6xf32> to vector<2x6xf32>
    %132 = arith.addf %130, %131 : vector<2x6xf32>
    %cst_39 = arith.constant dense<0xFF800000> : vector<2xf32>
    %133 = vector.multi_reduction <maximumf>, %132, %cst_39 [1] : vector<2x6xf32> to vector<2xf32>
    %134 = vector.shape_cast %133 : vector<2xf32> to vector<2x1xf32>
    %135 = vector.broadcast %134 : vector<2x1xf32> to vector<2x6xf32>
    %136 = arith.subf %132, %135 : vector<2x6xf32>
    %137 = math.exp %136 : vector<2x6xf32>
    %cst_40 = arith.constant dense<0.000000e+00> : vector<2xf32>
    %138 = vector.multi_reduction <add>, %137, %cst_40 [1] : vector<2x6xf32> to vector<2xf32>
    %139 = vector.shape_cast %138 : vector<2xf32> to vector<2x1xf32>
    %140 = tpu.reciprocal %139 {approx = true} : vector<2x1xf32> -> vector<2x1xf32>
    %141 = vector.broadcast %140 : vector<2x1xf32> to vector<2x6xf32>
    %142 = arith.mulf %137, %141 : vector<2x6xf32>
    %143 = vector.extract_strided_slice %142 {offsets = [0, 0], sizes = [2, 3], strides = [1, 1]} : vector<2x6xf32> to vector<2x3xf32>
    %cst_41 = arith.constant 1.000000e+01 : f32
    %144 = vector.broadcast %cst_41 : f32 to vector<2x3xf32>
    %145 = arith.mulf %144, %143 : vector<2x3xf32>
    %c2 = arith.constant 2 : index
    %c0_42 = arith.constant 0 : index
    %c0_43 = arith.constant 0 : index
    %146 = vector.load %arg7[%c2, %c0_42, %c0_43] : memref<8x2x3xf32, #tpu.memory_space<vmem>>, vector<1x2x3xf32>
    %147 = vector.shape_cast %146 : vector<1x2x3xf32> to vector<2x3xf32>
    %148 = vector.shape_cast %145 : vector<2x3xf32> to vector<1x2x3xf32>
    tpu.vector_store %arg7[%c2, %c0_42, %c0_43], %148 {strides = array<i32>} : memref<8x2x3xf32, #tpu.memory_space<vmem>>, vector<1x2x3xf32>,
    %cst_44 = arith.constant dense<0.000000e+00> : vector<2x128xf32>
    %149 = tpu.matmul %129, %6, %cst_44 {dimension_numbers = #tpu.dot_dimension_numbers<[1], [0], [0], [1], [0, 0, 1, 1], [], []>} : vector<2x32xf32>, vector<32x128xf32>, vector<2x128xf32> -> vector<2x128xf32>
    %150 = arith.addf %5, %149 : vector<2x128xf32>
    %151 = vector.extract_strided_slice %150 {offsets = [0, 0], sizes = [2, 32], strides = [1, 1]} : vector<2x128xf32> to vector<2x32xf32>
    %152 = arith.negf %151 : vector<2x32xf32>
    %153 = math.exp %152 : vector<2x32xf32>
    %cst_45 = arith.constant 1.000000e+00 : f32
    %154 = vector.broadcast %cst_45 : f32 to vector<2x32xf32>
    %155 = arith.addf %154, %153 : vector<2x32xf32>
    %156 = arith.divf %154, %155 : vector<2x32xf32>
    %157 = vector.extract_strided_slice %150 {offsets = [0, 32], sizes = [2, 32], strides = [1, 1]} : vector<2x128xf32> to vector<2x32xf32>
    %158 = arith.negf %157 : vector<2x32xf32>
    %159 = math.exp %158 : vector<2x32xf32>
    %cst_46 = arith.constant 1.000000e+00 : f32
    %160 = vector.broadcast %cst_46 : f32 to vector<2x32xf32>
    %161 = arith.addf %160, %159 : vector<2x32xf32>
    %162 = arith.divf %160, %161 : vector<2x32xf32>
    %163 = vector.extract_strided_slice %150 {offsets = [0, 64], sizes = [2, 32], strides = [1, 1]} : vector<2x128xf32> to vector<2x32xf32>
    %164 = math.tanh %163 : vector<2x32xf32>
    %165 = vector.extract_strided_slice %150 {offsets = [0, 96], sizes = [2, 32], strides = [1, 1]} : vector<2x128xf32> to vector<2x32xf32>
    %166 = arith.negf %165 : vector<2x32xf32>
    %167 = math.exp %166 : vector<2x32xf32>
    %cst_47 = arith.constant 1.000000e+00 : f32
    %168 = vector.broadcast %cst_47 : f32 to vector<2x32xf32>
    %169 = arith.addf %168, %167 : vector<2x32xf32>
    %170 = arith.divf %168, %169 : vector<2x32xf32>
    %171 = arith.mulf %162, %127 : vector<2x32xf32>
    %172 = arith.mulf %156, %164 : vector<2x32xf32>
    %173 = arith.addf %171, %172 : vector<2x32xf32>
    %174 = math.tanh %173 : vector<2x32xf32>
    %175 = arith.mulf %170, %174 : vector<2x32xf32>
    %cst_48 = arith.constant dense<0.000000e+00> : vector<2x6xf32>
    %176 = tpu.matmul %175, %7, %cst_48 {dimension_numbers = #tpu.dot_dimension_numbers<[1], [0], [0], [1], [0, 0, 1, 1], [], []>} : vector<2x32xf32>, vector<32x6xf32>, vector<2x6xf32> -> vector<2x6xf32>
    %177 = vector.broadcast %8 : vector<1x6xf32> to vector<2x6xf32>
    %178 = arith.addf %176, %177 : vector<2x6xf32>
    %cst_49 = arith.constant dense<0xFF800000> : vector<2xf32>
    %179 = vector.multi_reduction <maximumf>, %178, %cst_49 [1] : vector<2x6xf32> to vector<2xf32>
    %180 = vector.shape_cast %179 : vector<2xf32> to vector<2x1xf32>
    %181 = vector.broadcast %180 : vector<2x1xf32> to vector<2x6xf32>
    %182 = arith.subf %178, %181 : vector<2x6xf32>
    %183 = math.exp %182 : vector<2x6xf32>
    %cst_50 = arith.constant dense<0.000000e+00> : vector<2xf32>
    %184 = vector.multi_reduction <add>, %183, %cst_50 [1] : vector<2x6xf32> to vector<2xf32>
    %185 = vector.shape_cast %184 : vector<2xf32> to vector<2x1xf32>
    %186 = tpu.reciprocal %185 {approx = true} : vector<2x1xf32> -> vector<2x1xf32>
    %187 = vector.broadcast %186 : vector<2x1xf32> to vector<2x6xf32>
    %188 = arith.mulf %183, %187 : vector<2x6xf32>
    %189 = vector.extract_strided_slice %188 {offsets = [0, 0], sizes = [2, 3], strides = [1, 1]} : vector<2x6xf32> to vector<2x3xf32>
    %cst_51 = arith.constant 1.000000e+01 : f32
    %190 = vector.broadcast %cst_51 : f32 to vector<2x3xf32>
    %191 = arith.mulf %190, %189 : vector<2x3xf32>
    %c3 = arith.constant 3 : index
    %c0_52 = arith.constant 0 : index
    %c0_53 = arith.constant 0 : index
    %192 = vector.load %arg7[%c3, %c0_52, %c0_53] : memref<8x2x3xf32, #tpu.memory_space<vmem>>, vector<1x2x3xf32>
    %193 = vector.shape_cast %192 : vector<1x2x3xf32> to vector<2x3xf32>
    %194 = vector.shape_cast %191 : vector<2x3xf32> to vector<1x2x3xf32>
    tpu.vector_store %arg7[%c3, %c0_52, %c0_53], %194 {strides = array<i32>} : memref<8x2x3xf32, #tpu.memory_space<vmem>>, vector<1x2x3xf32>,
    %cst_54 = arith.constant dense<0.000000e+00> : vector<2x128xf32>
    %195 = tpu.matmul %175, %6, %cst_54 {dimension_numbers = #tpu.dot_dimension_numbers<[1], [0], [0], [1], [0, 0, 1, 1], [], []>} : vector<2x32xf32>, vector<32x128xf32>, vector<2x128xf32> -> vector<2x128xf32>
    %196 = arith.addf %5, %195 : vector<2x128xf32>
    %197 = vector.extract_strided_slice %196 {offsets = [0, 0], sizes = [2, 32], strides = [1, 1]} : vector<2x128xf32> to vector<2x32xf32>
    %198 = arith.negf %197 : vector<2x32xf32>
    %199 = math.exp %198 : vector<2x32xf32>
    %cst_55 = arith.constant 1.000000e+00 : f32
    %200 = vector.broadcast %cst_55 : f32 to vector<2x32xf32>
    %201 = arith.addf %200, %199 : vector<2x32xf32>
    %202 = arith.divf %200, %201 : vector<2x32xf32>
    %203 = vector.extract_strided_slice %196 {offsets = [0, 32], sizes = [2, 32], strides = [1, 1]} : vector<2x128xf32> to vector<2x32xf32>
    %204 = arith.negf %203 : vector<2x32xf32>
    %205 = math.exp %204 : vector<2x32xf32>
    %cst_56 = arith.constant 1.000000e+00 : f32
    %206 = vector.broadcast %cst_56 : f32 to vector<2x32xf32>
    %207 = arith.addf %206, %205 : vector<2x32xf32>
    %208 = arith.divf %206, %207 : vector<2x32xf32>
    %209 = vector.extract_strided_slice %196 {offsets = [0, 64], sizes = [2, 32], strides = [1, 1]} : vector<2x128xf32> to vector<2x32xf32>
    %210 = math.tanh %209 : vector<2x32xf32>
    %211 = vector.extract_strided_slice %196 {offsets = [0, 96], sizes = [2, 32], strides = [1, 1]} : vector<2x128xf32> to vector<2x32xf32>
    %212 = arith.negf %211 : vector<2x32xf32>
    %213 = math.exp %212 : vector<2x32xf32>
    %cst_57 = arith.constant 1.000000e+00 : f32
    %214 = vector.broadcast %cst_57 : f32 to vector<2x32xf32>
    %215 = arith.addf %214, %213 : vector<2x32xf32>
    %216 = arith.divf %214, %215 : vector<2x32xf32>
    %217 = arith.mulf %208, %173 : vector<2x32xf32>
    %218 = arith.mulf %202, %210 : vector<2x32xf32>
    %219 = arith.addf %217, %218 : vector<2x32xf32>
    %220 = math.tanh %219 : vector<2x32xf32>
    %221 = arith.mulf %216, %220 : vector<2x32xf32>
    %cst_58 = arith.constant dense<0.000000e+00> : vector<2x6xf32>
    %222 = tpu.matmul %221, %7, %cst_58 {dimension_numbers = #tpu.dot_dimension_numbers<[1], [0], [0], [1], [0, 0, 1, 1], [], []>} : vector<2x32xf32>, vector<32x6xf32>, vector<2x6xf32> -> vector<2x6xf32>
    %223 = vector.broadcast %8 : vector<1x6xf32> to vector<2x6xf32>
    %224 = arith.addf %222, %223 : vector<2x6xf32>
    %cst_59 = arith.constant dense<0xFF800000> : vector<2xf32>
    %225 = vector.multi_reduction <maximumf>, %224, %cst_59 [1] : vector<2x6xf32> to vector<2xf32>
    %226 = vector.shape_cast %225 : vector<2xf32> to vector<2x1xf32>
    %227 = vector.broadcast %226 : vector<2x1xf32> to vector<2x6xf32>
    %228 = arith.subf %224, %227 : vector<2x6xf32>
    %229 = math.exp %228 : vector<2x6xf32>
    %cst_60 = arith.constant dense<0.000000e+00> : vector<2xf32>
    %230 = vector.multi_reduction <add>, %229, %cst_60 [1] : vector<2x6xf32> to vector<2xf32>
    %231 = vector.shape_cast %230 : vector<2xf32> to vector<2x1xf32>
    %232 = tpu.reciprocal %231 {approx = true} : vector<2x1xf32> -> vector<2x1xf32>
    %233 = vector.broadcast %232 : vector<2x1xf32> to vector<2x6xf32>
    %234 = arith.mulf %229, %233 : vector<2x6xf32>
    %235 = vector.extract_strided_slice %234 {offsets = [0, 0], sizes = [2, 3], strides = [1, 1]} : vector<2x6xf32> to vector<2x3xf32>
    %cst_61 = arith.constant 1.000000e+01 : f32
    %236 = vector.broadcast %cst_61 : f32 to vector<2x3xf32>
    %237 = arith.mulf %236, %235 : vector<2x3xf32>
    %c4 = arith.constant 4 : index
    %c0_62 = arith.constant 0 : index
    %c0_63 = arith.constant 0 : index
    %238 = vector.load %arg7[%c4, %c0_62, %c0_63] : memref<8x2x3xf32, #tpu.memory_space<vmem>>, vector<1x2x3xf32>
    %239 = vector.shape_cast %238 : vector<1x2x3xf32> to vector<2x3xf32>
    %240 = vector.shape_cast %237 : vector<2x3xf32> to vector<1x2x3xf32>
    tpu.vector_store %arg7[%c4, %c0_62, %c0_63], %240 {strides = array<i32>} : memref<8x2x3xf32, #tpu.memory_space<vmem>>, vector<1x2x3xf32>,
    %cst_64 = arith.constant dense<0.000000e+00> : vector<2x128xf32>
    %241 = tpu.matmul %221, %6, %cst_64 {dimension_numbers = #tpu.dot_dimension_numbers<[1], [0], [0], [1], [0, 0, 1, 1], [], []>} : vector<2x32xf32>, vector<32x128xf32>, vector<2x128xf32> -> vector<2x128xf32>
    %242 = arith.addf %5, %241 : vector<2x128xf32>
    %243 = vector.extract_strided_slice %242 {offsets = [0, 0], sizes = [2, 32], strides = [1, 1]} : vector<2x128xf32> to vector<2x32xf32>
    %244 = arith.negf %243 : vector<2x32xf32>
    %245 = math.exp %244 : vector<2x32xf32>
    %cst_65 = arith.constant 1.000000e+00 : f32
    %246 = vector.broadcast %cst_65 : f32 to vector<2x32xf32>
    %247 = arith.addf %246, %245 : vector<2x32xf32>
    %248 = arith.divf %246, %247 : vector<2x32xf32>
    %249 = vector.extract_strided_slice %242 {offsets = [0, 32], sizes = [2, 32], strides = [1, 1]} : vector<2x128xf32> to vector<2x32xf32>
    %250 = arith.negf %249 : vector<2x32xf32>
    %251 = math.exp %250 : vector<2x32xf32>
    %cst_66 = arith.constant 1.000000e+00 : f32
    %252 = vector.broadcast %cst_66 : f32 to vector<2x32xf32>
    %253 = arith.addf %252, %251 : vector<2x32xf32>
    %254 = arith.divf %252, %253 : vector<2x32xf32>
    %255 = vector.extract_strided_slice %242 {offsets = [0, 64], sizes = [2, 32], strides = [1, 1]} : vector<2x128xf32> to vector<2x32xf32>
    %256 = math.tanh %255 : vector<2x32xf32>
    %257 = vector.extract_strided_slice %242 {offsets = [0, 96], sizes = [2, 32], strides = [1, 1]} : vector<2x128xf32> to vector<2x32xf32>
    %258 = arith.negf %257 : vector<2x32xf32>
    %259 = math.exp %258 : vector<2x32xf32>
    %cst_67 = arith.constant 1.000000e+00 : f32
    %260 = vector.broadcast %cst_67 : f32 to vector<2x32xf32>
    %261 = arith.addf %260, %259 : vector<2x32xf32>
    %262 = arith.divf %260, %261 : vector<2x32xf32>
    %263 = arith.mulf %254, %219 : vector<2x32xf32>
    %264 = arith.mulf %248, %256 : vector<2x32xf32>
    %265 = arith.addf %263, %264 : vector<2x32xf32>
    %266 = math.tanh %265 : vector<2x32xf32>
    %267 = arith.mulf %262, %266 : vector<2x32xf32>
    %cst_68 = arith.constant dense<0.000000e+00> : vector<2x6xf32>
    %268 = tpu.matmul %267, %7, %cst_68 {dimension_numbers = #tpu.dot_dimension_numbers<[1], [0], [0], [1], [0, 0, 1, 1], [], []>} : vector<2x32xf32>, vector<32x6xf32>, vector<2x6xf32> -> vector<2x6xf32>
    %269 = vector.broadcast %8 : vector<1x6xf32> to vector<2x6xf32>
    %270 = arith.addf %268, %269 : vector<2x6xf32>
    %cst_69 = arith.constant dense<0xFF800000> : vector<2xf32>
    %271 = vector.multi_reduction <maximumf>, %270, %cst_69 [1] : vector<2x6xf32> to vector<2xf32>
    %272 = vector.shape_cast %271 : vector<2xf32> to vector<2x1xf32>
    %273 = vector.broadcast %272 : vector<2x1xf32> to vector<2x6xf32>
    %274 = arith.subf %270, %273 : vector<2x6xf32>
    %275 = math.exp %274 : vector<2x6xf32>
    %cst_70 = arith.constant dense<0.000000e+00> : vector<2xf32>
    %276 = vector.multi_reduction <add>, %275, %cst_70 [1] : vector<2x6xf32> to vector<2xf32>
    %277 = vector.shape_cast %276 : vector<2xf32> to vector<2x1xf32>
    %278 = tpu.reciprocal %277 {approx = true} : vector<2x1xf32> -> vector<2x1xf32>
    %279 = vector.broadcast %278 : vector<2x1xf32> to vector<2x6xf32>
    %280 = arith.mulf %275, %279 : vector<2x6xf32>
    %281 = vector.extract_strided_slice %280 {offsets = [0, 0], sizes = [2, 3], strides = [1, 1]} : vector<2x6xf32> to vector<2x3xf32>
    %cst_71 = arith.constant 1.000000e+01 : f32
    %282 = vector.broadcast %cst_71 : f32 to vector<2x3xf32>
    %283 = arith.mulf %282, %281 : vector<2x3xf32>
    %c5 = arith.constant 5 : index
    %c0_72 = arith.constant 0 : index
    %c0_73 = arith.constant 0 : index
    %284 = vector.load %arg7[%c5, %c0_72, %c0_73] : memref<8x2x3xf32, #tpu.memory_space<vmem>>, vector<1x2x3xf32>
    %285 = vector.shape_cast %284 : vector<1x2x3xf32> to vector<2x3xf32>
    %286 = vector.shape_cast %283 : vector<2x3xf32> to vector<1x2x3xf32>
    tpu.vector_store %arg7[%c5, %c0_72, %c0_73], %286 {strides = array<i32>} : memref<8x2x3xf32, #tpu.memory_space<vmem>>, vector<1x2x3xf32>,
    %cst_74 = arith.constant dense<0.000000e+00> : vector<2x128xf32>
    %287 = tpu.matmul %267, %6, %cst_74 {dimension_numbers = #tpu.dot_dimension_numbers<[1], [0], [0], [1], [0, 0, 1, 1], [], []>} : vector<2x32xf32>, vector<32x128xf32>, vector<2x128xf32> -> vector<2x128xf32>
    %288 = arith.addf %5, %287 : vector<2x128xf32>
    %289 = vector.extract_strided_slice %288 {offsets = [0, 0], sizes = [2, 32], strides = [1, 1]} : vector<2x128xf32> to vector<2x32xf32>
    %290 = arith.negf %289 : vector<2x32xf32>
    %291 = math.exp %290 : vector<2x32xf32>
    %cst_75 = arith.constant 1.000000e+00 : f32
    %292 = vector.broadcast %cst_75 : f32 to vector<2x32xf32>
    %293 = arith.addf %292, %291 : vector<2x32xf32>
    %294 = arith.divf %292, %293 : vector<2x32xf32>
    %295 = vector.extract_strided_slice %288 {offsets = [0, 32], sizes = [2, 32], strides = [1, 1]} : vector<2x128xf32> to vector<2x32xf32>
    %296 = arith.negf %295 : vector<2x32xf32>
    %297 = math.exp %296 : vector<2x32xf32>
    %cst_76 = arith.constant 1.000000e+00 : f32
    %298 = vector.broadcast %cst_76 : f32 to vector<2x32xf32>
    %299 = arith.addf %298, %297 : vector<2x32xf32>
    %300 = arith.divf %298, %299 : vector<2x32xf32>
    %301 = vector.extract_strided_slice %288 {offsets = [0, 64], sizes = [2, 32], strides = [1, 1]} : vector<2x128xf32> to vector<2x32xf32>
    %302 = math.tanh %301 : vector<2x32xf32>
    %303 = vector.extract_strided_slice %288 {offsets = [0, 96], sizes = [2, 32], strides = [1, 1]} : vector<2x128xf32> to vector<2x32xf32>
    %304 = arith.negf %303 : vector<2x32xf32>
    %305 = math.exp %304 : vector<2x32xf32>
    %cst_77 = arith.constant 1.000000e+00 : f32
    %306 = vector.broadcast %cst_77 : f32 to vector<2x32xf32>
    %307 = arith.addf %306, %305 : vector<2x32xf32>
    %308 = arith.divf %306, %307 : vector<2x32xf32>
    %309 = arith.mulf %300, %265 : vector<2x32xf32>
    %310 = arith.mulf %294, %302 : vector<2x32xf32>
    %311 = arith.addf %309, %310 : vector<2x32xf32>
    %312 = math.tanh %311 : vector<2x32xf32>
    %313 = arith.mulf %308, %312 : vector<2x32xf32>
    %cst_78 = arith.constant dense<0.000000e+00> : vector<2x6xf32>
    %314 = tpu.matmul %313, %7, %cst_78 {dimension_numbers = #tpu.dot_dimension_numbers<[1], [0], [0], [1], [0, 0, 1, 1], [], []>} : vector<2x32xf32>, vector<32x6xf32>, vector<2x6xf32> -> vector<2x6xf32>
    %315 = vector.broadcast %8 : vector<1x6xf32> to vector<2x6xf32>
    %316 = arith.addf %314, %315 : vector<2x6xf32>
    %cst_79 = arith.constant dense<0xFF800000> : vector<2xf32>
    %317 = vector.multi_reduction <maximumf>, %316, %cst_79 [1] : vector<2x6xf32> to vector<2xf32>
    %318 = vector.shape_cast %317 : vector<2xf32> to vector<2x1xf32>
    %319 = vector.broadcast %318 : vector<2x1xf32> to vector<2x6xf32>
    %320 = arith.subf %316, %319 : vector<2x6xf32>
    %321 = math.exp %320 : vector<2x6xf32>
    %cst_80 = arith.constant dense<0.000000e+00> : vector<2xf32>
    %322 = vector.multi_reduction <add>, %321, %cst_80 [1] : vector<2x6xf32> to vector<2xf32>
    %323 = vector.shape_cast %322 : vector<2xf32> to vector<2x1xf32>
    %324 = tpu.reciprocal %323 {approx = true} : vector<2x1xf32> -> vector<2x1xf32>
    %325 = vector.broadcast %324 : vector<2x1xf32> to vector<2x6xf32>
    %326 = arith.mulf %321, %325 : vector<2x6xf32>
    %327 = vector.extract_strided_slice %326 {offsets = [0, 0], sizes = [2, 3], strides = [1, 1]} : vector<2x6xf32> to vector<2x3xf32>
    %cst_81 = arith.constant 1.000000e+01 : f32
    %328 = vector.broadcast %cst_81 : f32 to vector<2x3xf32>
    %329 = arith.mulf %328, %327 : vector<2x3xf32>
    %c6 = arith.constant 6 : index
    %c0_82 = arith.constant 0 : index
    %c0_83 = arith.constant 0 : index
    %330 = vector.load %arg7[%c6, %c0_82, %c0_83] : memref<8x2x3xf32, #tpu.memory_space<vmem>>, vector<1x2x3xf32>
    %331 = vector.shape_cast %330 : vector<1x2x3xf32> to vector<2x3xf32>
    %332 = vector.shape_cast %329 : vector<2x3xf32> to vector<1x2x3xf32>
    tpu.vector_store %arg7[%c6, %c0_82, %c0_83], %332 {strides = array<i32>} : memref<8x2x3xf32, #tpu.memory_space<vmem>>, vector<1x2x3xf32>,
    %cst_84 = arith.constant dense<0.000000e+00> : vector<2x128xf32>
    %333 = tpu.matmul %313, %6, %cst_84 {dimension_numbers = #tpu.dot_dimension_numbers<[1], [0], [0], [1], [0, 0, 1, 1], [], []>} : vector<2x32xf32>, vector<32x128xf32>, vector<2x128xf32> -> vector<2x128xf32>
    %334 = arith.addf %5, %333 : vector<2x128xf32>
    %335 = vector.extract_strided_slice %334 {offsets = [0, 0], sizes = [2, 32], strides = [1, 1]} : vector<2x128xf32> to vector<2x32xf32>
    %336 = arith.negf %335 : vector<2x32xf32>
    %337 = math.exp %336 : vector<2x32xf32>
    %cst_85 = arith.constant 1.000000e+00 : f32
    %338 = vector.broadcast %cst_85 : f32 to vector<2x32xf32>
    %339 = arith.addf %338, %337 : vector<2x32xf32>
    %340 = arith.divf %338, %339 : vector<2x32xf32>
    %341 = vector.extract_strided_slice %334 {offsets = [0, 32], sizes = [2, 32], strides = [1, 1]} : vector<2x128xf32> to vector<2x32xf32>
    %342 = arith.negf %341 : vector<2x32xf32>
    %343 = math.exp %342 : vector<2x32xf32>
    %cst_86 = arith.constant 1.000000e+00 : f32
    %344 = vector.broadcast %cst_86 : f32 to vector<2x32xf32>
    %345 = arith.addf %344, %343 : vector<2x32xf32>
    %346 = arith.divf %344, %345 : vector<2x32xf32>
    %347 = vector.extract_strided_slice %334 {offsets = [0, 64], sizes = [2, 32], strides = [1, 1]} : vector<2x128xf32> to vector<2x32xf32>
    %348 = math.tanh %347 : vector<2x32xf32>
    %349 = vector.extract_strided_slice %334 {offsets = [0, 96], sizes = [2, 32], strides = [1, 1]} : vector<2x128xf32> to vector<2x32xf32>
    %350 = arith.negf %349 : vector<2x32xf32>
    %351 = math.exp %350 : vector<2x32xf32>
    %cst_87 = arith.constant 1.000000e+00 : f32
    %352 = vector.broadcast %cst_87 : f32 to vector<2x32xf32>
    %353 = arith.addf %352, %351 : vector<2x32xf32>
    %354 = arith.divf %352, %353 : vector<2x32xf32>
    %355 = arith.mulf %346, %311 : vector<2x32xf32>
    %356 = arith.mulf %340, %348 : vector<2x32xf32>
    %357 = arith.addf %355, %356 : vector<2x32xf32>
    %358 = math.tanh %357 : vector<2x32xf32>
    %359 = arith.mulf %354, %358 : vector<2x32xf32>
    %cst_88 = arith.constant dense<0.000000e+00> : vector<2x6xf32>
    %360 = tpu.matmul %359, %7, %cst_88 {dimension_numbers = #tpu.dot_dimension_numbers<[1], [0], [0], [1], [0, 0, 1, 1], [], []>} : vector<2x32xf32>, vector<32x6xf32>, vector<2x6xf32> -> vector<2x6xf32>
    %361 = vector.broadcast %8 : vector<1x6xf32> to vector<2x6xf32>
    %362 = arith.addf %360, %361 : vector<2x6xf32>
    %cst_89 = arith.constant dense<0xFF800000> : vector<2xf32>
    %363 = vector.multi_reduction <maximumf>, %362, %cst_89 [1] : vector<2x6xf32> to vector<2xf32>
    %364 = vector.shape_cast %363 : vector<2xf32> to vector<2x1xf32>
    %365 = vector.broadcast %364 : vector<2x1xf32> to vector<2x6xf32>
    %366 = arith.subf %362, %365 : vector<2x6xf32>
    %367 = math.exp %366 : vector<2x6xf32>
    %cst_90 = arith.constant dense<0.000000e+00> : vector<2xf32>
    %368 = vector.multi_reduction <add>, %367, %cst_90 [1] : vector<2x6xf32> to vector<2xf32>
    %369 = vector.shape_cast %368 : vector<2xf32> to vector<2x1xf32>
    %370 = tpu.reciprocal %369 {approx = true} : vector<2x1xf32> -> vector<2x1xf32>
    %371 = vector.broadcast %370 : vector<2x1xf32> to vector<2x6xf32>
    %372 = arith.mulf %367, %371 : vector<2x6xf32>
    %373 = vector.extract_strided_slice %372 {offsets = [0, 0], sizes = [2, 3], strides = [1, 1]} : vector<2x6xf32> to vector<2x3xf32>
    %cst_91 = arith.constant 1.000000e+01 : f32
    %374 = vector.broadcast %cst_91 : f32 to vector<2x3xf32>
    %375 = arith.mulf %374, %373 : vector<2x3xf32>
    %c7 = arith.constant 7 : index
    %c0_92 = arith.constant 0 : index
    %c0_93 = arith.constant 0 : index
    %376 = vector.load %arg7[%c7, %c0_92, %c0_93] : memref<8x2x3xf32, #tpu.memory_space<vmem>>, vector<1x2x3xf32>
    %377 = vector.shape_cast %376 : vector<1x2x3xf32> to vector<2x3xf32>
    %378 = vector.shape_cast %375 : vector<2x3xf32> to vector<1x2x3xf32>
    tpu.vector_store %arg7[%c7, %c0_92, %c0_93], %378 {strides = array<i32>} : memref<8x2x3xf32, #tpu.memory_space<vmem>>, vector<1x2x3xf32>,
    %c0_94 = arith.constant 0 : index
    %c0_95 = arith.constant 0 : index
    %379 = vector.load %arg6[%c0_94, %c0_95] : memref<2x3xf32, #tpu.memory_space<vmem>>, vector<2x3xf32>
    tpu.vector_store %arg6[%c0_94, %c0_95], %373 {strides = array<i32>} : memref<2x3xf32, #tpu.memory_space<vmem>>, vector<2x3xf32>,
    return
  }
}

</mosaic_0001>

<llo_original>
// kernel: tpu_custom_call.1
$region0: #{tpu_custom_call.1}
  #allocation0 [shape = 'u32[]', space=smem, size = 0x4, offset = 0x4, fixed_abs, tag = 'smem constant byte address 0x4 - core index']
  #allocation1 [shape = 'u32[72,128]{1,0:T(1,128)}', space=vmem, size = 0x9000, scoped, tag = 'internal scratch']
  %s0 = inlined_call_operand.vmem [shape: f32[2,4], index: 0, kind: input, shape index: {}]
  %s1 = inlined_call_operand.vmem [shape: f32[4,128], index: 1, kind: input, shape index: {}]
  %s2 = inlined_call_operand.vmem [shape: f32[32,128], index: 2, kind: input, shape index: {}]
  %s3 = inlined_call_operand.vmem [shape: f32[1,128], index: 3, kind: input, shape index: {}]
  %s4 = inlined_call_operand.vmem [shape: f32[32,6], index: 4, kind: input, shape index: {}]
  %s5 = inlined_call_operand.vmem [shape: f32[1,6], index: 5, kind: input, shape index: {}]
  %s6 = inlined_call_operand.hbm [shape: f32[2,3], index: 6, kind: output, shape index: {0}]
  %s7 = inlined_call_operand.vmem [shape: f32[8,2,3], index: 7, kind: output, shape index: {1}]
  %8 = xla_tuple %s6, %s7
  %s9 = sld [smem:[#allocation0]]
  $region42: #{tpu_custom_call.1} parent=0
    _
  %s11 = ssub.s32 1, %s9
  %s12 = scalar_select 0, %s11, %s9
  $region1: #{tpu_custom_call.1} parent=0
    #allocation2 [shape = 'u8[1024]{0}', space=vmem, size = 0x400, scoped, tag = 'output window, operand 0, single buffered']
    #allocation3 [shape = 's32[1]{0}', space=sflag, size = 0x4, scoped, tag = 'scoped memory for tpu_custom_call.1']
    %13 = vsyncpa [#allocation3], 0
    // Predicated region
    $region2: #{tpu_custom_call.1} parent=1 // pred_check
      _
    $region3: #{tpu_custom_call.1} parent=1 // pred_check_branch
      %15 = sbr.rel (0) target = $region5
    $region4: #{tpu_custom_call.1} parent=1 // pred_region
      _
    $region5: #{tpu_custom_call.1} parent=1 // pred_fallthru
      _
    // Predicated region
    $region6: #{tpu_custom_call.1} parent=1 // pred_check
      _
    $region7: #{tpu_custom_call.1} parent=1 // pred_check_branch
      %17 = sbr.rel (0) target = $region9
    $region8: #{tpu_custom_call.1} parent=1 // pred_region
      _
    $region9: #{tpu_custom_call.1} parent=1 // pred_fallthru
      _
    // Predicated region
    $region10: #{tpu_custom_call.1} parent=1 // pred_check
      _
    $region11: #{tpu_custom_call.1} parent=1 // pred_check_branch
      %19 = sbr.rel (0) target = $region13
    $region12: #{tpu_custom_call.1} parent=1 // pred_region
      _
    $region13: #{tpu_custom_call.1} parent=1 // pred_fallthru
      _
    // Predicated region
    $region14: #{tpu_custom_call.1} parent=1 // pred_check
      _
    $region15: #{tpu_custom_call.1} parent=1 // pred_check_branch
      %21 = sbr.rel (0) target = $region17
    $region16: #{tpu_custom_call.1} parent=1 // pred_region
      _
    $region17: #{tpu_custom_call.1} parent=1 // pred_fallthru
      _
    // Predicated region
    $region18: #{tpu_custom_call.1} parent=1 // pred_check
      _
    $region19: #{tpu_custom_call.1} parent=1 // pred_check_branch
      %23 = sbr.rel (0) target = $region21
    $region20: #{tpu_custom_call.1} parent=1 // pred_region
      _
    $region21: #{tpu_custom_call.1} parent=1 // pred_fallthru
      _
    // Predicated region
    $region22: #{tpu_custom_call.1} parent=1 // pred_check
      _
    $region23: #{tpu_custom_call.1} parent=1 // pred_check_branch
      %25 = sbr.rel (0) target = $region25
    $region24: #{tpu_custom_call.1} parent=1 // pred_region
      _
    $region25: #{tpu_custom_call.1} parent=1 // pred_fallthru
      _
    %v26 = vld [vmem:[%s0] sm:$0x3]
    %v27 = vld [vmem:[%s1] sm:$0xf]
    %v28 = vld [vmem:[%s3] sm:$0x1]
    %v30 = vperm.slane %v28, 0
    %vm32 = vcmask 31744
    %v34 = vsel %vm32, %v26, 0
    %vm36 = vcmask 1043456
    %v38 = vsel %vm36, %v27, 0
    %40 = vmatpush.msra.mxu0 0.0
    %41 = vmatpush.msra.mxu0 0.0
    %42 = vmatpush.msra.mxu0 0.0
    %43 = vmatpush.msra.mxu0 0.0
    %44 = vmatpush.msra.mxu0 0.0
    %45 = vmatpush.msra.mxu0 0.0
    %46 = vmatpush.msra.mxu0 0.0
    %47 = vmatpush.msra.mxu0 0.0
    %48 = vmatpush.msra.mxu0 0.0
    %49 = vmatpush.msra.mxu0 0.0
    %50 = vmatpush.msra.mxu0 0.0
    %51 = vmatpush.msra.mxu0 0.0
    %52 = vmatpush.msra.mxu0 0.0
    %53 = vmatpush.msra.mxu0 0.0
    %54 = vmatpush.msra.mxu0 0.0
    %55 = vmatpush.msra.mxu0 %v38
    %56 = vmatmul.f32.gmra.mxu0 %v34
    %v57 = vpop.f32.mrf.mxu0
    %v58 = vadd.f32 %v30, %v57
    %59 = vdwg.mxu0
    %v60 = vld [vmem:[%s2] sm:$0xff]
    %v61 = vld [vmem:[%s2 + $0x8] sm:$0xff]
    %v62 = vld [vmem:[%s2 + $0x10] sm:$0xff]
    %v63 = vld [vmem:[%s2 + $0x18] sm:$0xff]
    %v64 = vld [vmem:[%s4] sm:$0xff]
    %v65 = vld [vmem:[%s4 + $0x8] sm:$0xff]
    %v66 = vld [vmem:[%s4 + $0x10] sm:$0xff]
    %v67 = vld [vmem:[%s4 + $0x18] sm:$0xff]
    %v68 = vld [vmem:[%s5] sm:$0x1]
    %vm69 = vcmask 261120
    %v71 = vsel %vm69, 0.0, 0
    %73 = vmatpush.msra.mxu0 0.0
    %74 = vmatpush.msra.mxu0 0.0
    %75 = vmatpush.msra.mxu0 0.0
    %76 = vmatpush.msra.mxu0 0.0
    %77 = vmatpush.msra.mxu0 0.0
    %78 = vmatpush.msra.mxu0 0.0
    %79 = vmatpush.msra.mxu0 0.0
    %80 = vmatpush.msra.mxu0 0.0
    %81 = vmatpush.msra.mxu0 0.0
    %82 = vmatpush.msra.mxu0 0.0
    %83 = vmatpush.msra.mxu0 0.0
    %84 = vmatpush.msra.mxu0 0.0
    %85 = vmatpush.msra.mxu0 %v63
    %86 = vmatpush.msra.mxu0 %v62
    %87 = vmatpush.msra.mxu0 %v61
    %88 = vmatpush.msra.mxu0 %v60
    %89 = vmatmul.f32.gmra.mxu0 %v71
    %v90 = vpop.f32.mrf.mxu0
    %v91 = vadd.f32 0.0, %v90
    %92 = vdwg.mxu0
    %v93 = vadd.f32 %v58, %v91
    %v94 = vxor.u32 %v93, 2147483648
    %v95 = vmul.f32 %v94, 1.442695
    %v96 = vpow.pop %v95
    %v97 = vadd.f32 %v96, 1.0
    %v98 = vrcp.pop %v97
    %v99 = vmul.f32 %v97, %v98
    %v100 = vsub.f32 1.0, %v99
    %v101 = vmul.f32 %v98, %v100
    %v102 = vadd.f32 %v98, %v101
    %vm103 = vweird.f32 %v97
    %vm104 = vweird.f32 %v98
    %vm105 = vmor %vm103, %vm104
    %v106 = vsel %vm105, %v98, %v102
    %v107 = vand.u32 2147483647, %v97
    %vm108 = vcmp.eq.f32.partialorder %v107, 8.507059e+37
    %v109 = vand.u32 %v97, 2147483648
    %v110 = vor.u32 1.1754944e-38, %v109
    %v111 = vsel %vm108, %v110, %v106
    %v112 = vmul.f32 1.0, %v111
    %v113 = vtanh.pop %v93
    %v114 = vmul.f32 %v112, 0.0
    %116 = vrot.lane.b32.xlu0 %v113, 64
    %v117 = vpop.permute.xlu0 %116
    %v119 = vmul.f32 %v112, %v117
    %121 = vrot.lane.b32.xlu0 %v119, 32
    %v122 = vpop.permute.xlu0 %121
    %v124 = vadd.f32 %v114, %v122
    %v125 = vtanh.pop %v124
    %127 = vrot.lane.b32.xlu0 %v125, 64
    %v128 = vpop.permute.xlu0 %127
    %v130 = vmul.f32 %v112, %v128
    %v132 = vperm.slane %v68, 0
    %135 = vrot.lane.b32.xlu0 %v130, 32
    %v136 = vpop.permute.xlu0 %135
    %v137 = vsel %vm69, %v136, 0
    %139 = vmatpush.msra.mxu0 0.0
    %140 = vmatpush.msra.mxu0 0.0
    %141 = vmatpush.msra.mxu0 0.0
    %142 = vmatpush.msra.mxu0 0.0
    %143 = vmatpush.msra.mxu0 0.0
    %144 = vmatpush.msra.mxu0 0.0
    %145 = vmatpush.msra.mxu0 0.0
    %146 = vmatpush.msra.mxu0 0.0
    %147 = vmatpush.msra.mxu0 0.0
    %148 = vmatpush.msra.mxu0 0.0
    %149 = vmatpush.msra.mxu0 0.0
    %150 = vmatpush.msra.mxu0 0.0
    %151 = vmatpush.msra.mxu0 %v67
    %152 = vmatpush.msra.mxu0 %v66
    %153 = vmatpush.msra.mxu0 %v65
    %154 = vmatpush.msra.mxu0 %v64
    %155 = vmatmul.f32.gmra.mxu0 %v137
    %v156 = vpop.f32.mrf.mxu0
    %v157 = vadd.f32 %v132, %v156
    %158 = vdwg.mxu0
    %vm159 = vcmask 41984
    %v160 = vsel %vm159, %v157, -inf
    %161 = vmax.xlane.f32.xlu0 %v160
    %v162 = vpop.xlane.xlu0 %161
    %v163 = vsub.f32 %v157, %v162
    %v164 = vmul.f32 %v163, 1.442695
    %v165 = vpow.pop %v164
    %v166 = vsel %vm159, %v165, 0.0
    %167 = vadd.xlane.f32.xlu0 %v166
    %v168 = vpop.xlane.xlu0 %167
    %v169 = vrcp.pop %v168
    %v170 = vmul.f32 %v165, %v169
    %v171 = vmul.f32 %v170, 10.0
    %vm172 = vcmask 17408
    %173 = vst.msk [vmem:[%s7] sm:$0x3] %vm172, %v171
    %174 = vmatpush.msra.mxu0 0.0
    %175 = vmatpush.msra.mxu0 0.0
    %176 = vmatpush.msra.mxu0 0.0
    %177 = vmatpush.msra.mxu0 0.0
    %178 = vmatpush.msra.mxu0 0.0
    %179 = vmatpush.msra.mxu0 0.0
    %180 = vmatpush.msra.mxu0 0.0
    %181 = vmatpush.msra.mxu0 0.0
    %182 = vmatpush.msra.mxu0 0.0
    %183 = vmatpush.msra.mxu0 0.0
    %184 = vmatpush.msra.mxu0 0.0
    %185 = vmatpush.msra.mxu0 0.0
    %186 = vmatpush.msra.mxu0 %v63
    %187 = vmatpush.msra.mxu0 %v62
    %188 = vmatpush.msra.mxu0 %v61
    %189 = vmatpush.msra.mxu0 %v60
    %190 = vmatmul.f32.gmra.mxu0 %v137
    %v191 = vpop.f32.mrf.mxu0
    %v192 = vadd.f32 0.0, %v191
    %193 = vdwg.mxu0
    %v194 = vadd.f32 %v58, %v192
    %v195 = vxor.u32 %v194, 2147483648
    %v196 = vmul.f32 %v195, 1.442695
    %v197 = vpow.pop %v196
    %v198 = vadd.f32 %v197, 1.0
    %v199 = vrcp.pop %v198
    %v200 = vmul.f32 %v198, %v199
    %v201 = vsub.f32 1.0, %v200
    %v202 = vmul.f32 %v199, %v201
    %v203 = vadd.f32 %v199, %v202
    %vm204 = vweird.f32 %v198
    %vm205 = vweird.f32 %v199
    %vm206 = vmor %vm204, %vm205
    %v207 = vsel %vm206, %v199, %v203
    %v208 = vand.u32 2147483647, %v198
    %vm209 = vcmp.eq.f32.partialorder %v208, 8.507059e+37
    %v210 = vand.u32 %v198, 2147483648
    %v211 = vor.u32 1.1754944e-38, %v210
    %v212 = vsel %vm209, %v211, %v207
    %v213 = vmul.f32 1.0, %v212
    %v214 = vtanh.pop %v194
    %v215 = vmul.f32 %v213, %v124
    %217 = vrot.lane.b32.xlu0 %v214, 64
    %v218 = vpop.permute.xlu0 %217
    %v220 = vmul.f32 %v213, %v218
    %222 = vrot.lane.b32.xlu0 %v220, 32
    %v223 = vpop.permute.xlu0 %222
    %v225 = vadd.f32 %v215, %v223
    %v226 = vtanh.pop %v225
    %228 = vrot.lane.b32.xlu0 %v226, 64
    %v229 = vpop.permute.xlu0 %228
    %v231 = vmul.f32 %v213, %v229
    %233 = vrot.lane.b32.xlu0 %v231, 32
    %v234 = vpop.permute.xlu0 %233
    %v235 = vsel %vm69, %v234, 0
    %237 = vmatpush.msra.mxu0 0.0
    %238 = vmatpush.msra.mxu0 0.0
    %239 = vmatpush.msra.mxu0 0.0
    %240 = vmatpush.msra.mxu0 0.0
    %241 = vmatpush.msra.mxu0 0.0
    %242 = vmatpush.msra.mxu0 0.0
    %243 = vmatpush.msra.mxu0 0.0
    %244 = vmatpush.msra.mxu0 0.0
    %245 = vmatpush.msra.mxu0 0.0
    %246 = vmatpush.msra.mxu0 0.0
    %247 = vmatpush.msra.mxu0 0.0
    %248 = vmatpush.msra.mxu0 0.0
    %249 = vmatpush.msra.mxu0 %v67
    %250 = vmatpush.msra.mxu0 %v66
    %251 = vmatpush.msra.mxu0 %v65
    %252 = vmatpush.msra.mxu0 %v64
    %253 = vmatmul.f32.gmra.mxu0 %v235
    %v254 = vpop.f32.mrf.mxu0
    %v255 = vadd.f32 %v132, %v254
    %256 = vdwg.mxu0
    %v257 = vsel %vm159, %v255, -inf
    %258 = vmax.xlane.f32.xlu0 %v257
    %v259 = vpop.xlane.xlu0 %258
    %v260 = vsub.f32 %v255, %v259
    %v261 = vmul.f32 %v260, 1.442695
    %v262 = vpow.pop %v261
    %v263 = vsel %vm159, %v262, 0.0
    %264 = vadd.xlane.f32.xlu0 %v263
    %v265 = vpop.xlane.xlu0 %264
    %v266 = vrcp.pop %v265
    %v267 = vmul.f32 %v262, %v266
    %v268 = vmul.f32 %v267, 10.0
    %s269 = scalar_lea.vmem %s7, 2
    %270 = vst.msk [vmem:[%s269] sm:$0x3] %vm172, %v268
    %271 = vmatpush.msra.mxu0 0.0
    %272 = vmatpush.msra.mxu0 0.0
    %273 = vmatpush.msra.mxu0 0.0
    %274 = vmatpush.msra.mxu0 0.0
    %275 = vmatpush.msra.mxu0 0.0
    %276 = vmatpush.msra.mxu0 0.0
    %277 = vmatpush.msra.mxu0 0.0
    %278 = vmatpush.msra.mxu0 0.0
    %279 = vmatpush.msra.mxu0 0.0
    %280 = vmatpush.msra.mxu0 0.0
    %281 = vmatpush.msra.mxu0 0.0
    %282 = vmatpush.msra.mxu0 0.0
    %283 = vmatpush.msra.mxu0 %v63
    %284 = vmatpush.msra.mxu0 %v62
    %285 = vmatpush.msra.mxu0 %v61
    %286 = vmatpush.msra.mxu0 %v60
    %287 = vmatmul.f32.gmra.mxu0 %v235
    %v288 = vpop.f32.mrf.mxu0
    %v289 = vadd.f32 0.0, %v288
    %290 = vdwg.mxu0
    %v291 = vadd.f32 %v58, %v289
    %v292 = vxor.u32 %v291, 2147483648
    %v293 = vmul.f32 %v292, 1.442695
    %v294 = vpow.pop %v293
    %v295 = vadd.f32 %v294, 1.0
    %v296 = vrcp.pop %v295
    %v297 = vmul.f32 %v295, %v296
    %v298 = vsub.f32 1.0, %v297
    %v299 = vmul.f32 %v296, %v298
    %v300 = vadd.f32 %v296, %v299
    %vm301 = vweird.f32 %v295
    %vm302 = vweird.f32 %v296
    %vm303 = vmor %vm301, %vm302
    %v304 = vsel %vm303, %v296, %v300
    %v305 = vand.u32 2147483647, %v295
    %vm306 = vcmp.eq.f32.partialorder %v305, 8.507059e+37
    %v307 = vand.u32 %v295, 2147483648
    %v308 = vor.u32 1.1754944e-38, %v307
    %v309 = vsel %vm306, %v308, %v304
    %v310 = vmul.f32 1.0, %v309
    %v311 = vtanh.pop %v291
    %v312 = vmul.f32 %v310, %v225
    %314 = vrot.lane.b32.xlu0 %v311, 64
    %v315 = vpop.permute.xlu0 %314
    %v317 = vmul.f32 %v310, %v315
    %319 = vrot.lane.b32.xlu0 %v317, 32
    %v320 = vpop.permute.xlu0 %319
    %v322 = vadd.f32 %v312, %v320
    %v323 = vtanh.pop %v322
    %325 = vrot.lane.b32.xlu0 %v323, 64
    %v326 = vpop.permute.xlu0 %325
    %v328 = vmul.f32 %v310, %v326
    %330 = vrot.lane.b32.xlu0 %v328, 32
    %v331 = vpop.permute.xlu0 %330
    %v332 = vsel %vm69, %v331, 0
    %334 = vmatpush.msra.mxu0 0.0
    %335 = vmatpush.msra.mxu0 0.0
    %336 = vmatpush.msra.mxu0 0.0
    %337 = vmatpush.msra.mxu0 0.0
    %338 = vmatpush.msra.mxu0 0.0
    %339 = vmatpush.msra.mxu0 0.0
    %340 = vmatpush.msra.mxu0 0.0
    %341 = vmatpush.msra.mxu0 0.0
    %342 = vmatpush.msra.mxu0 0.0
    %343 = vmatpush.msra.mxu0 0.0
    %344 = vmatpush.msra.mxu0 0.0
    %345 = vmatpush.msra.mxu0 0.0
    %346 = vmatpush.msra.mxu0 %v67
    %347 = vmatpush.msra.mxu0 %v66
    %348 = vmatpush.msra.mxu0 %v65
    %349 = vmatpush.msra.mxu0 %v64
    %350 = vmatmul.f32.gmra.mxu0 %v332
    %v351 = vpop.f32.mrf.mxu0
    %v352 = vadd.f32 %v132, %v351
    %353 = vdwg.mxu0
    %v354 = vsel %vm159, %v352, -inf
    %355 = vmax.xlane.f32.xlu0 %v354
    %v356 = vpop.xlane.xlu0 %355
    %v357 = vsub.f32 %v352, %v356
    %v358 = vmul.f32 %v357, 1.442695
    %v359 = vpow.pop %v358
    %v360 = vsel %vm159, %v359, 0.0
    %361 = vadd.xlane.f32.xlu0 %v360
    %v362 = vpop.xlane.xlu0 %361
    %v363 = vrcp.pop %v362
    %v364 = vmul.f32 %v359, %v363
    %v365 = vmul.f32 %v364, 10.0
    %s366 = scalar_lea.vmem %s7, 4
    %367 = vst.msk [vmem:[%s366] sm:$0x3] %vm172, %v365
    %368 = vmatpush.msra.mxu0 0.0
    %369 = vmatpush.msra.mxu0 0.0
    %370 = vmatpush.msra.mxu0 0.0
    %371 = vmatpush.msra.mxu0 0.0
    %372 = vmatpush.msra.mxu0 0.0
    %373 = vmatpush.msra.mxu0 0.0
    %374 = vmatpush.msra.mxu0 0.0
    %375 = vmatpush.msra.mxu0 0.0
    %376 = vmatpush.msra.mxu0 0.0
    %377 = vmatpush.msra.mxu0 0.0
    %378 = vmatpush.msra.mxu0 0.0
    %379 = vmatpush.msra.mxu0 0.0
    %380 = vmatpush.msra.mxu0 %v63
    %381 = vmatpush.msra.mxu0 %v62
    %382 = vmatpush.msra.mxu0 %v61
    %383 = vmatpush.msra.mxu0 %v60
    %384 = vmatmul.f32.gmra.mxu0 %v332
    %v385 = vpop.f32.mrf.mxu0
    %v386 = vadd.f32 0.0, %v385
    %387 = vdwg.mxu0
    %v388 = vadd.f32 %v58, %v386
    %v389 = vxor.u32 %v388, 2147483648
    %v390 = vmul.f32 %v389, 1.442695
    %v391 = vpow.pop %v390
    %v392 = vadd.f32 %v391, 1.0
    %v393 = vrcp.pop %v392
    %v394 = vmul.f32 %v392, %v393
    %v395 = vsub.f32 1.0, %v394
    %v396 = vmul.f32 %v393, %v395
    %v397 = vadd.f32 %v393, %v396
    %vm398 = vweird.f32 %v392
    %vm399 = vweird.f32 %v393
    %vm400 = vmor %vm398, %vm399
    %v401 = vsel %vm400, %v393, %v397
    %v402 = vand.u32 2147483647, %v392
    %vm403 = vcmp.eq.f32.partialorder %v402, 8.507059e+37
    %v404 = vand.u32 %v392, 2147483648
    %v405 = vor.u32 1.1754944e-38, %v404
    %v406 = vsel %vm403, %v405, %v401
    %v407 = vmul.f32 1.0, %v406
    %v408 = vtanh.pop %v388
    %v409 = vmul.f32 %v407, %v322
    %411 = vrot.lane.b32.xlu0 %v408, 64
    %v412 = vpop.permute.xlu0 %411
    %v414 = vmul.f32 %v407, %v412
    %416 = vrot.lane.b32.xlu0 %v414, 32
    %v417 = vpop.permute.xlu0 %416
    %v419 = vadd.f32 %v409, %v417
    %v420 = vtanh.pop %v419
    %422 = vrot.lane.b32.xlu0 %v420, 64
    %v423 = vpop.permute.xlu0 %422
    %v425 = vmul.f32 %v407, %v423
    %427 = vrot.lane.b32.xlu0 %v425, 32
    %v428 = vpop.permute.xlu0 %427
    %v429 = vsel %vm69, %v428, 0
    %431 = vmatpush.msra.mxu0 0.0
    %432 = vmatpush.msra.mxu0 0.0
    %433 = vmatpush.msra.mxu0 0.0
    %434 = vmatpush.msra.mxu0 0.0
    %435 = vmatpush.msra.mxu0 0.0
    %436 = vmatpush.msra.mxu0 0.0
    %437 = vmatpush.msra.mxu0 0.0
    %438 = vmatpush.msra.mxu0 0.0
    %439 = vmatpush.msra.mxu0 0.0
    %440 = vmatpush.msra.mxu0 0.0
    %441 = vmatpush.msra.mxu0 0.0
    %442 = vmatpush.msra.mxu0 0.0
    %443 = vmatpush.msra.mxu0 %v67
    %444 = vmatpush.msra.mxu0 %v66
    %445 = vmatpush.msra.mxu0 %v65
    %446 = vmatpush.msra.mxu0 %v64
    %447 = vmatmul.f32.gmra.mxu0 %v429
    %v448 = vpop.f32.mrf.mxu0
    %v449 = vadd.f32 %v132, %v448
    %450 = vdwg.mxu0
    %v451 = vsel %vm159, %v449, -inf
    %452 = vmax.xlane.f32.xlu0 %v451
    %v453 = vpop.xlane.xlu0 %452
    %v454 = vsub.f32 %v449, %v453
    %v455 = vmul.f32 %v454, 1.442695
    %v456 = vpow.pop %v455
    %v457 = vsel %vm159, %v456, 0.0
    %458 = vadd.xlane.f32.xlu0 %v457
    %v459 = vpop.xlane.xlu0 %458
    %v460 = vrcp.pop %v459
    %v461 = vmul.f32 %v456, %v460
    %v462 = vmul.f32 %v461, 10.0
    %s463 = scalar_lea.vmem %s7, 6
    %464 = vst.msk [vmem:[%s463] sm:$0x3] %vm172, %v462
    %465 = vmatpush.msra.mxu0 0.0
    %466 = vmatpush.msra.mxu0 0.0
    %467 = vmatpush.msra.mxu0 0.0
    %468 = vmatpush.msra.mxu0 0.0
    %469 = vmatpush.msra.mxu0 0.0
    %470 = vmatpush.msra.mxu0 0.0
    %471 = vmatpush.msra.mxu0 0.0
    %472 = vmatpush.msra.mxu0 0.0
    %473 = vmatpush.msra.mxu0 0.0
    %474 = vmatpush.msra.mxu0 0.0
    %475 = vmatpush.msra.mxu0 0.0
    %476 = vmatpush.msra.mxu0 0.0
    %477 = vmatpush.msra.mxu0 %v63
    %478 = vmatpush.msra.mxu0 %v62
    %479 = vmatpush.msra.mxu0 %v61
    %480 = vmatpush.msra.mxu0 %v60
    %481 = vmatmul.f32.gmra.mxu0 %v429
    %v482 = vpop.f32.mrf.mxu0
    %v483 = vadd.f32 0.0, %v482
    %484 = vdwg.mxu0
    %v485 = vadd.f32 %v58, %v483
    %v486 = vxor.u32 %v485, 2147483648
    %v487 = vmul.f32 %v486, 1.442695
    %v488 = vpow.pop %v487
    %v489 = vadd.f32 %v488, 1.0
    %v490 = vrcp.pop %v489
    %v491 = vmul.f32 %v489, %v490
    %v492 = vsub.f32 1.0, %v491
    %v493 = vmul.f32 %v490, %v492
    %v494 = vadd.f32 %v490, %v493
    %vm495 = vweird.f32 %v489
    %vm496 = vweird.f32 %v490
    %vm497 = vmor %vm495, %vm496
    %v498 = vsel %vm497, %v490, %v494
    %v499 = vand.u32 2147483647, %v489
    %vm500 = vcmp.eq.f32.partialorder %v499, 8.507059e+37
    %v501 = vand.u32 %v489, 2147483648
    %v502 = vor.u32 1.1754944e-38, %v501
    %v503 = vsel %vm500, %v502, %v498
    %v504 = vmul.f32 1.0, %v503
    %v505 = vtanh.pop %v485
    %v506 = vmul.f32 %v504, %v419
    %508 = vrot.lane.b32.xlu0 %v505, 64
    %v509 = vpop.permute.xlu0 %508
    %v511 = vmul.f32 %v504, %v509
    %513 = vrot.lane.b32.xlu0 %v511, 32
    %v514 = vpop.permute.xlu0 %513
    %v516 = vadd.f32 %v506, %v514
    %v517 = vtanh.pop %v516
    %519 = vrot.lane.b32.xlu0 %v517, 64
    %v520 = vpop.permute.xlu0 %519
    %v522 = vmul.f32 %v504, %v520
    %524 = vrot.lane.b32.xlu0 %v522, 32
    %v525 = vpop.permute.xlu0 %524
    %v526 = vsel %vm69, %v525, 0
    %528 = vmatpush.msra.mxu0 0.0
    %529 = vmatpush.msra.mxu0 0.0
    %530 = vmatpush.msra.mxu0 0.0
    %531 = vmatpush.msra.mxu0 0.0
    %532 = vmatpush.msra.mxu0 0.0
    %533 = vmatpush.msra.mxu0 0.0
    %534 = vmatpush.msra.mxu0 0.0
    %535 = vmatpush.msra.mxu0 0.0
    %536 = vmatpush.msra.mxu0 0.0
    %537 = vmatpush.msra.mxu0 0.0
    %538 = vmatpush.msra.mxu0 0.0
    %539 = vmatpush.msra.mxu0 0.0
    %540 = vmatpush.msra.mxu0 %v67
    %541 = vmatpush.msra.mxu0 %v66
    %542 = vmatpush.msra.mxu0 %v65
    %543 = vmatpush.msra.mxu0 %v64
    %544 = vmatmul.f32.gmra.mxu0 %v526
    %v545 = vpop.f32.mrf.mxu0
    %v546 = vadd.f32 %v132, %v545
    %547 = vdwg.mxu0
    %v548 = vsel %vm159, %v546, -inf
    %549 = vmax.xlane.f32.xlu0 %v548
    %v550 = vpop.xlane.xlu0 %549
    %v551 = vsub.f32 %v546, %v550
    %v552 = vmul.f32 %v551, 1.442695
    %v553 = vpow.pop %v552
    %v554 = vsel %vm159, %v553, 0.0
    %555 = vadd.xlane.f32.xlu0 %v554
    %v556 = vpop.xlane.xlu0 %555
    %v557 = vrcp.pop %v556
    %v558 = vmul.f32 %v553, %v557
    %v559 = vmul.f32 %v558, 10.0
    %s560 = scalar_lea.vmem %s7, 8
    %561 = vst.msk [vmem:[%s560] sm:$0x3] %vm172, %v559
    %562 = vmatpush.msra.mxu0 0.0
    %563 = vmatpush.msra.mxu0 0.0
    %564 = vmatpush.msra.mxu0 0.0
    %565 = vmatpush.msra.mxu0 0.0
    %566 = vmatpush.msra.mxu0 0.0
    %567 = vmatpush.msra.mxu0 0.0
    %568 = vmatpush.msra.mxu0 0.0
    %569 = vmatpush.msra.mxu0 0.0
    %570 = vmatpush.msra.mxu0 0.0
    %571 = vmatpush.msra.mxu0 0.0
    %572 = vmatpush.msra.mxu0 0.0
    %573 = vmatpush.msra.mxu0 0.0
    %574 = vmatpush.msra.mxu0 %v63
    %575 = vmatpush.msra.mxu0 %v62
    %576 = vmatpush.msra.mxu0 %v61
    %577 = vmatpush.msra.mxu0 %v60
    %578 = vmatmul.f32.gmra.mxu0 %v526
    %v579 = vpop.f32.mrf.mxu0
    %v580 = vadd.f32 0.0, %v579
    %581 = vdwg.mxu0
    %v582 = vadd.f32 %v58, %v580
    %v583 = vxor.u32 %v582, 2147483648
    %v584 = vmul.f32 %v583, 1.442695
    %v585 = vpow.pop %v584
    %v586 = vadd.f32 %v585, 1.0
    %v587 = vrcp.pop %v586
    %v588 = vmul.f32 %v586, %v587
    %v589 = vsub.f32 1.0, %v588
    %v590 = vmul.f32 %v587, %v589
    %v591 = vadd.f32 %v587, %v590
    %vm592 = vweird.f32 %v586
    %vm593 = vweird.f32 %v587
    %vm594 = vmor %vm592, %vm593
    %v595 = vsel %vm594, %v587, %v591
    %v596 = vand.u32 2147483647, %v586
    %vm597 = vcmp.eq.f32.partialorder %v596, 8.507059e+37
    %v598 = vand.u32 %v586, 2147483648
    %v599 = vor.u32 1.1754944e-38, %v598
    %v600 = vsel %vm597, %v599, %v595
    %v601 = vmul.f32 1.0, %v600
    %v602 = vtanh.pop %v582
    %v603 = vmul.f32 %v601, %v516
    %605 = vrot.lane.b32.xlu0 %v602, 64
    %v606 = vpop.permute.xlu0 %605
    %v608 = vmul.f32 %v601, %v606
    %610 = vrot.lane.b32.xlu0 %v608, 32
    %v611 = vpop.permute.xlu0 %610
    %v613 = vadd.f32 %v603, %v611
    %v614 = vtanh.pop %v613
    %616 = vrot.lane.b32.xlu0 %v614, 64
    %v617 = vpop.permute.xlu0 %616
    %v619 = vmul.f32 %v601, %v617
    %621 = vrot.lane.b32.xlu0 %v619, 32
    %v622 = vpop.permute.xlu0 %621
    %v623 = vsel %vm69, %v622, 0
    %625 = vmatpush.msra.mxu0 0.0
    %626 = vmatpush.msra.mxu0 0.0
    %627 = vmatpush.msra.mxu0 0.0
    %628 = vmatpush.msra.mxu0 0.0
    %629 = vmatpush.msra.mxu0 0.0
    %630 = vmatpush.msra.mxu0 0.0
    %631 = vmatpush.msra.mxu0 0.0
    %632 = vmatpush.msra.mxu0 0.0
    %633 = vmatpush.msra.mxu0 0.0
    %634 = vmatpush.msra.mxu0 0.0
    %635 = vmatpush.msra.mxu0 0.0
    %636 = vmatpush.msra.mxu0 0.0
    %637 = vmatpush.msra.mxu0 %v67
    %638 = vmatpush.msra.mxu0 %v66
    %639 = vmatpush.msra.mxu0 %v65
    %640 = vmatpush.msra.mxu0 %v64
    %641 = vmatmul.f32.gmra.mxu0 %v623
    %v642 = vpop.f32.mrf.mxu0
    %v643 = vadd.f32 %v132, %v642
    %644 = vdwg.mxu0
    %v645 = vsel %vm159, %v643, -inf
    %646 = vmax.xlane.f32.xlu0 %v645
    %v647 = vpop.xlane.xlu0 %646
    %v648 = vsub.f32 %v643, %v647
    %v649 = vmul.f32 %v648, 1.442695
    %v650 = vpow.pop %v649
    %v651 = vsel %vm159, %v650, 0.0
    %652 = vadd.xlane.f32.xlu0 %v651
    %v653 = vpop.xlane.xlu0 %652
    %v654 = vrcp.pop %v653
    %v655 = vmul.f32 %v650, %v654
    %v656 = vmul.f32 %v655, 10.0
    %s657 = scalar_lea.vmem %s7, 10
    %658 = vst.msk [vmem:[%s657] sm:$0x3] %vm172, %v656
    %659 = vmatpush.msra.mxu0 0.0
    %660 = vmatpush.msra.mxu0 0.0
    %661 = vmatpush.msra.mxu0 0.0
    %662 = vmatpush.msra.mxu0 0.0
    %663 = vmatpush.msra.mxu0 0.0
    %664 = vmatpush.msra.mxu0 0.0
    %665 = vmatpush.msra.mxu0 0.0
    %666 = vmatpush.msra.mxu0 0.0
    %667 = vmatpush.msra.mxu0 0.0
    %668 = vmatpush.msra.mxu0 0.0
    %669 = vmatpush.msra.mxu0 0.0
    %670 = vmatpush.msra.mxu0 0.0
    %671 = vmatpush.msra.mxu0 %v63
    %672 = vmatpush.msra.mxu0 %v62
    %673 = vmatpush.msra.mxu0 %v61
    %674 = vmatpush.msra.mxu0 %v60
    %675 = vmatmul.f32.gmra.mxu0 %v623
    %v676 = vpop.f32.mrf.mxu0
    %v677 = vadd.f32 0.0, %v676
    %678 = vdwg.mxu0
    %v679 = vadd.f32 %v58, %v677
    %v680 = vxor.u32 %v679, 2147483648
    %v681 = vmul.f32 %v680, 1.442695
    %v682 = vpow.pop %v681
    %v683 = vadd.f32 %v682, 1.0
    %v684 = vrcp.pop %v683
    %v685 = vmul.f32 %v683, %v684
    %v686 = vsub.f32 1.0, %v685
    %v687 = vmul.f32 %v684, %v686
    %v688 = vadd.f32 %v684, %v687
    %vm689 = vweird.f32 %v683
    %vm690 = vweird.f32 %v684
    %vm691 = vmor %vm689, %vm690
    %v692 = vsel %vm691, %v684, %v688
    %v693 = vand.u32 2147483647, %v683
    %vm694 = vcmp.eq.f32.partialorder %v693, 8.507059e+37
    %v695 = vand.u32 %v683, 2147483648
    %v696 = vor.u32 1.1754944e-38, %v695
    %v697 = vsel %vm694, %v696, %v692
    %v698 = vmul.f32 1.0, %v697
    %v699 = vtanh.pop %v679
    %v700 = vmul.f32 %v698, %v613
    %702 = vrot.lane.b32.xlu0 %v699, 64
    %v703 = vpop.permute.xlu0 %702
    %v705 = vmul.f32 %v698, %v703
    %707 = vrot.lane.b32.xlu0 %v705, 32
    %v708 = vpop.permute.xlu0 %707
    %v710 = vadd.f32 %v700, %v708
    %v711 = vtanh.pop %v710
    %713 = vrot.lane.b32.xlu0 %v711, 64
    %v714 = vpop.permute.xlu0 %713
    %v716 = vmul.f32 %v698, %v714
    %718 = vrot.lane.b32.xlu0 %v716, 32
    %v719 = vpop.permute.xlu0 %718
    %v720 = vsel %vm69, %v719, 0
    %722 = vmatpush.msra.mxu0 0.0
    %723 = vmatpush.msra.mxu0 0.0
    %724 = vmatpush.msra.mxu0 0.0
    %725 = vmatpush.msra.mxu0 0.0
    %726 = vmatpush.msra.mxu0 0.0
    %727 = vmatpush.msra.mxu0 0.0
    %728 = vmatpush.msra.mxu0 0.0
    %729 = vmatpush.msra.mxu0 0.0
    %730 = vmatpush.msra.mxu0 0.0
    %731 = vmatpush.msra.mxu0 0.0
    %732 = vmatpush.msra.mxu0 0.0
    %733 = vmatpush.msra.mxu0 0.0
    %734 = vmatpush.msra.mxu0 %v67
    %735 = vmatpush.msra.mxu0 %v66
    %736 = vmatpush.msra.mxu0 %v65
    %737 = vmatpush.msra.mxu0 %v64
    %738 = vmatmul.f32.gmra.mxu0 %v720
    %v739 = vpop.f32.mrf.mxu0
    %v740 = vadd.f32 %v132, %v739
    %741 = vdwg.mxu0
    %v742 = vsel %vm159, %v740, -inf
    %743 = vmax.xlane.f32.xlu0 %v742
    %v744 = vpop.xlane.xlu0 %743
    %v745 = vsub.f32 %v740, %v744
    %v746 = vmul.f32 %v745, 1.442695
    %v747 = vpow.pop %v746
    %v748 = vsel %vm159, %v747, 0.0
    %749 = vadd.xlane.f32.xlu0 %v748
    %v750 = vpop.xlane.xlu0 %749
    %v751 = vrcp.pop %v750
    %v752 = vmul.f32 %v747, %v751
    %v753 = vmul.f32 %v752, 10.0
    %s754 = scalar_lea.vmem %s7, 12
    %755 = vst.msk [vmem:[%s754] sm:$0x3] %vm172, %v753
    %756 = vmatpush.msra.mxu0 0.0
    %757 = vmatpush.msra.mxu0 0.0
    %758 = vmatpush.msra.mxu0 0.0
    %759 = vmatpush.msra.mxu0 0.0
    %760 = vmatpush.msra.mxu0 0.0
    %761 = vmatpush.msra.mxu0 0.0
    %762 = vmatpush.msra.mxu0 0.0
    %763 = vmatpush.msra.mxu0 0.0
    %764 = vmatpush.msra.mxu0 0.0
    %765 = vmatpush.msra.mxu0 0.0
    %766 = vmatpush.msra.mxu0 0.0
    %767 = vmatpush.msra.mxu0 0.0
    %768 = vmatpush.msra.mxu0 %v63
    %769 = vmatpush.msra.mxu0 %v62
    %770 = vmatpush.msra.mxu0 %v61
    %771 = vmatpush.msra.mxu0 %v60
    %772 = vmatmul.f32.gmra.mxu0 %v720
    %v773 = vpop.f32.mrf.mxu0
    %v774 = vadd.f32 0.0, %v773
    %775 = vdwg.mxu0
    %v776 = vadd.f32 %v58, %v774
    %v777 = vxor.u32 %v776, 2147483648
    %v778 = vmul.f32 %v777, 1.442695
    %v779 = vpow.pop %v778
    %v780 = vadd.f32 %v779, 1.0
    %v781 = vrcp.pop %v780
    %v782 = vmul.f32 %v780, %v781
    %v783 = vsub.f32 1.0, %v782
    %v784 = vmul.f32 %v781, %v783
    %v785 = vadd.f32 %v781, %v784
    %vm786 = vweird.f32 %v780
    %vm787 = vweird.f32 %v781
    %vm788 = vmor %vm786, %vm787
    %v789 = vsel %vm788, %v781, %v785
    %v790 = vand.u32 2147483647, %v780
    %vm791 = vcmp.eq.f32.partialorder %v790, 8.507059e+37
    %v792 = vand.u32 %v780, 2147483648
    %v793 = vor.u32 1.1754944e-38, %v792
    %v794 = vsel %vm791, %v793, %v789
    %v795 = vmul.f32 1.0, %v794
    %v796 = vtanh.pop %v776
    %v797 = vmul.f32 %v795, %v710
    %799 = vrot.lane.b32.xlu0 %v796, 64
    %v800 = vpop.permute.xlu0 %799
    %v802 = vmul.f32 %v795, %v800
    %804 = vrot.lane.b32.xlu0 %v802, 32
    %v805 = vpop.permute.xlu0 %804
    %v807 = vadd.f32 %v797, %v805
    %v808 = vtanh.pop %v807
    %810 = vrot.lane.b32.xlu0 %v808, 64
    %v811 = vpop.permute.xlu0 %810
    %v813 = vmul.f32 %v795, %v811
    %815 = vrot.lane.b32.xlu0 %v813, 32
    %v816 = vpop.permute.xlu0 %815
    %v817 = vsel %vm69, %v816, 0
    %819 = vmatpush.msra.mxu0 0.0
    %820 = vmatpush.msra.mxu0 0.0
    %821 = vmatpush.msra.mxu0 0.0
    %822 = vmatpush.msra.mxu0 0.0
    %823 = vmatpush.msra.mxu0 0.0
    %824 = vmatpush.msra.mxu0 0.0
    %825 = vmatpush.msra.mxu0 0.0
    %826 = vmatpush.msra.mxu0 0.0
    %827 = vmatpush.msra.mxu0 0.0
    %828 = vmatpush.msra.mxu0 0.0
    %829 = vmatpush.msra.mxu0 0.0
    %830 = vmatpush.msra.mxu0 0.0
    %831 = vmatpush.msra.mxu0 %v67
    %832 = vmatpush.msra.mxu0 %v66
    %833 = vmatpush.msra.mxu0 %v65
    %834 = vmatpush.msra.mxu0 %v64
    %835 = vmatmul.f32.gmra.mxu0 %v817
    %v836 = vpop.f32.mrf.mxu0
    %v837 = vadd.f32 %v132, %v836
    %838 = vdwg.mxu0
    %v839 = vsel %vm159, %v837, -inf
    %840 = vmax.xlane.f32.xlu0 %v839
    %v841 = vpop.xlane.xlu0 %840
    %v842 = vsub.f32 %v837, %v841
    %v843 = vmul.f32 %v842, 1.442695
    %v844 = vpow.pop %v843
    %v845 = vsel %vm159, %v844, 0.0
    %846 = vadd.xlane.f32.xlu0 %v845
    %v847 = vpop.xlane.xlu0 %846
    %v848 = vrcp.pop %v847
    %v849 = vmul.f32 %v844, %v848
    %v850 = vmul.f32 %v849, 10.0
    %s851 = scalar_lea.vmem %s7, 14
    %852 = vst.msk [vmem:[%s851] sm:$0x3] %vm172, %v850
    %853 = vst.msk [vmem:[#allocation2] sm:$0x3] %vm172, %v849
    // Predicated region
    $region26: #{tpu_custom_call.1} parent=1 // pred_check
      _
    $region27: #{tpu_custom_call.1} parent=1 // pred_check_branch
      %855 = sbr.rel (0) target = $region29
    $region28: #{tpu_custom_call.1} parent=1 // pred_region
      %857 = vsyncadd [#allocation3], 0
      %s859 = sshll.u32 [#allocation2], 4
      %s860 = int_to_ptr.vmem [resolvable:$true] %s859
      %s861 = sshll.u32 %s6, 4
      %s862 = int_to_ptr.hbm [resolvable:$true] %s861
      %864 = dma.vmem_to_hbm [thread:$0]  %s860, 32, %s862, [#allocation3]
    $region29: #{tpu_custom_call.1} parent=1 // pred_fallthru
      _
    // Predicated region
    $region30: #{tpu_custom_call.1} parent=1 // pred_check
      _
    $region31: #{tpu_custom_call.1} parent=1 // pred_check_branch
      %866 = sbr.rel (0) target = $region33
    $region32: #{tpu_custom_call.1} parent=1 // pred_region
      _
    $region33: #{tpu_custom_call.1} parent=1 // pred_fallthru
      _
    // Predicated region
    $region34: #{tpu_custom_call.1} parent=1 // pred_check
      _
    $region35: #{tpu_custom_call.1} parent=1 // pred_check_branch
      %868 = sbr.rel (0) target = $region37
    $region36: #{tpu_custom_call.1} parent=1 // pred_region
      %870 = dma.done [#allocation3], 32
    $region37: #{tpu_custom_call.1} parent=1 // pred_fallthru
      _
    // Predicated region
    $region38: #{tpu_custom_call.1} parent=1 // pred_check
      _
    $region39: #{tpu_custom_call.1} parent=1 // pred_check_branch
      %872 = sbr.rel (0) target = $region41
    $region40: #{tpu_custom_call.1} parent=1 // pred_region
      _
    $region41: #{tpu_custom_call.1} parent=1 // pred_fallthru
      _
    %873 = vsyncpa [#allocation3], 1

</llo_original>
